<compile_context>
chip_gen: v7x
topology: tpu7x:2x2x1
jax: 0.10.0
libtpu: 0.0.40
codegen_flags: <defaults>
</compile_context>

<pallas_src>
import jax
import jax.numpy as jnp
from jax.experimental import pallas as pl
from jax.experimental.pallas import tpu as pltpu

_HIGH = jax.lax.Precision.HIGHEST
BN_EPS = 1e-5


def _round_up(x, mult):
    return ((x + mult - 1) // mult) * mult


def _vmem_capacity_bytes():
    try:
        return int(pltpu.get_tpu_info().vmem_capacity_bytes)
    except Exception:
        return 64 * 1024 * 1024  # conservative default (v7x has 64 MiB / TC)


def _pick_tile_and_limit(n, m, c1, c2, c_widest, c_last, param_bytes):
    """Lane-dense (multiple of 128) n-tile budgeted against the actual vmem_limit."""
    cap = _vmem_capacity_bytes()
    vmem_limit = int(min(cap * 3 // 4, 100 * 1024 * 1024))
    m_pad = _round_up(m, 128)
    # Fixed residents (each double-buffered by the pipeline):
    #   known (m,3) block lane-pads 3 -> 128; known_feats (C2, m) bf16; all params.
    fixed = (2 * _round_up(m, 8) * 128 * 4
             + 2 * _round_up(c2, 16) * m_pad * 2
             + 2 * param_bytes)
    budget = max(vmem_limit - fixed, 4 * 1024 * 1024)
    # Per-point cost: pipelined I/O tiles (x2 buffers) + in-kernel working set
    #   (~4 live f32 (m,) columns: work / row / a_unnorm / mask-equivalent, plus
    #    interp and ~3 activation slabs of the widest channel count).
    io_per_pt = 2 * (3 * 4 + c1 * 2 + c_last * 4)
    work_per_pt = 4 * (4 * m + c2 + 3 * c_widest)
    t = budget // max(io_per_pt + work_per_pt, 1)
    t = max(128, min(4096, (t // 128) * 128))
    return int(min(t, _round_up(n, 128))), vmem_limit


def _make_fused_fp_kernel(num_layers):
    """three_nn + three_interpolate + (concat folded into conv0) + full MLP, one kernel."""

    def kernel(xyz_u_ref, xyz_k_ref, uf_ref, kf_ref, *rest):
        out_ref = rest[-1]
        params = rest[:-1]

        xyz_u = xyz_u_ref[0]                                       # (3, tn)  f32
        xyz_k = xyz_k_ref[0]                                       # (m, 3)   f32

        # Pairwise squared distances (m, tn): unrolled VPU squared differences.
        # (m,1) - (1,tn) broadcasts; exact f32, >= 0 by construction, no MXU use.
        d2 = None
        for j in range(3):
            diff = xyz_k[:, j:j + 1] - xyz_u[j:j + 1, :]           # (m, tn)
            d2 = diff * diff if d2 is None else d2 + diff * diff

        m = d2.shape[0]
        row = jax.lax.broadcasted_iota(jnp.int32, d2.shape, 0).astype(jnp.float32)
        m_f = jnp.float32(m)

        # three_nn: 3 smallest distances per column; accumulate the soft-assignment
        # matrix directly with select+add (no onehot cast/mul), skip the sentinel
        # update on the last iteration (work is dead afterwards).
        work = d2
        a_unnorm = jnp.zeros(d2.shape, jnp.float32)
        norm = jnp.zeros((1, d2.shape[1]), jnp.float32)
        for it in range(3):
            min_val = jnp.min(work, axis=0, keepdims=True)         # (1, tn)  XLU
            ismin = work <= min_val                                # (m, tn)
            idx_min = jnp.min(jnp.where(ismin, row, m_f),
                              axis=0, keepdims=True)               # (1, tn)  first-min idx
            mask = row == idx_min                                  # (m, tn)  exact onehot
            recip = 1.0 / (jnp.sqrt(min_val) + 1e-8)               # (1, tn)
            a_unnorm = a_unnorm + jnp.where(mask, recip, 0.0)
            norm = norm + recip
            if it < 2:
                work = jnp.where(mask, jnp.float32(1e30), work)

        inv_norm = 1.0 / norm                                      # (1, tn) only
        A = (a_unnorm * inv_norm).astype(jnp.bfloat16)             # (m, tn)

        # three_interpolate as one bf16 MXU matmul: (C2, m) @ (m, tn) -> (C2, tn) f32
        interp = jnp.dot(kf_ref[0], A, preferred_element_type=jnp.float32)

        # layer 0: concat folded into the conv -> W0a @ interp + W0b @ unknow_feats
        w0a = params[0][...]                                       # (C0, C2)  bf16
        w0b = params[1][...]                                       # (C0, C1)  bf16
        s0 = params[2][...]                                        # (C0, 1)   f32
        b0 = params[3][...]
        y = (jnp.dot(w0a, interp.astype(jnp.bfloat16),
                     preferred_element_type=jnp.float32)
             + jnp.dot(w0b, uf_ref[0],                             # uf already bf16
                       preferred_element_type=jnp.float32))
        x = jnp.maximum(y * s0 + b0, 0.0)                          # fused BN (eval) + ReLU

        # remaining fused conv1x1 + BN + ReLU layers, activations stay in VMEM
        p = 4
        for _ in range(num_layers - 1):
            w = params[p][...]
            s = params[p + 1][...]
            b = params[p + 2][...]
            p += 3
            y = jnp.dot(w, x.astype(jnp.bfloat16),
                        preferred_element_type=jnp.float32)
            x = jnp.maximum(y * s + b, 0.0)

        out_ref[0] = x.astype(out_ref.dtype)

    return kernel


def pointnet_fp_forward(unknown, known, unknow_feats, known_feats, layers, *, tile_n=None):
    B, n, _ = unknown.shape
    _, m, _ = known.shape
    C1 = unknow_feats.shape[1]
    C2 = known_feats.shape[1]
    num_layers = len(layers)
    C_last = layers[-1][0].shape[0]
    c_widest = max([C1 + C2] + [W.shape[0] for (W, _, _) in layers])

    param_bytes = sum(int(W.size) * 2 + int(s.size) * 4 + int(b.size) * 4
                      for (W, s, b) in layers)
    auto_tile, vmem_limit = _pick_tile_and_limit(n, m, C1, C2, c_widest, C_last, param_bytes)
    if tile_n is None:
        tile_n = auto_tile
    n_pad = _round_up(n, tile_n)
    n_tiles = n_pad // tile_n

    # Wrapper-side layout plumbing:
    #  * unknown -> channel-first (B, 3, n_pad) so per-point scalars / d2 / A are lane-dense
    #  * pad n to a multiple of tile_n (>= 128) for unmasked, lane-dense stores
    #  * feature streams pre-cast to bf16 (half the HBM bytes, no per-tile casts)
    #  * conv weights pre-cast to bf16; first-layer weight split at the concat boundary
    unknown_t = jnp.swapaxes(unknown, 1, 2)
    uf_b = unknow_feats.astype(jnp.bfloat16)
    if n_pad != n:
        unknown_t = jnp.pad(unknown_t, ((0, 0), (0, 0), (0, n_pad - n)))
        uf_b = jnp.pad(uf_b, ((0, 0), (0, 0), (0, n_pad - n)))
    kf_b = known_feats.astype(jnp.bfloat16)

    W0, s0, b0 = layers[0]
    W0a = W0[:, :C2].astype(jnp.bfloat16)
    W0b = W0[:, C2:].astype(jnp.bfloat16)
    param_args = [W0a, W0b, s0, b0]
    param_specs = [pl.BlockSpec(a.shape, lambda b, i: (0, 0)) for a in param_args]
    for (W, s, bb) in layers[1:]:
        Wb16 = W.astype(jnp.bfloat16)
        param_args += [Wb16, s, bb]
        param_specs += [pl.BlockSpec(a.shape, lambda b, i: (0, 0)) for a in (Wb16, s, bb)]

    out = pl.pallas_call(
        _make_fused_fp_kernel(num_layers),
        out_shape=jax.ShapeDtypeStruct((B, C_last, n_pad), jnp.float32),
        grid=(B, n_tiles),
        in_specs=[
            pl.BlockSpec((1, 3, tile_n), lambda b, i: (b, 0, i)),   # unknown (channel-first)
            pl.BlockSpec((1, m, 3), lambda b, i: (b, 0, 0)),        # known (whole per batch)
            pl.BlockSpec((1, C1, tile_n), lambda b, i: (b, 0, i)),  # unknow_feats tile (bf16)
            pl.BlockSpec((1, C2, m), lambda b, i: (b, 0, 0)),       # known_feats (whole, bf16)
        ] + param_specs,
        out_specs=pl.BlockSpec((1, C_last, tile_n), lambda b, i: (b, 0, i)),
        compiler_params=pltpu.CompilerParams(
            dimension_semantics=("parallel", "parallel"),
            vmem_limit_bytes=vmem_limit),
    )(unknown_t, known, uf_b, kf_b, *param_args)

    return out[:, :, :n]


def init_params(mlp, key):
    """Deterministic params: kaiming-normal conv weights, identity-stat eval BN."""
    layers = []
    for i in range(len(mlp) - 1):
        key, sub = jax.random.split(key)
        fan_in = mlp[i]
        W = jax.random.normal(sub, (mlp[i + 1], mlp[i]), jnp.float32) * jnp.sqrt(2.0 / fan_in)
        gamma = jnp.ones((mlp[i + 1], 1), jnp.float32)
        beta = jnp.zeros((mlp[i + 1], 1), jnp.float32)
        running_mean = jnp.zeros((mlp[i + 1], 1), jnp.float32)
        running_var = jnp.ones((mlp[i + 1], 1), jnp.float32)
        scale = gamma / jnp.sqrt(running_var + BN_EPS)
        shift = beta - running_mean * scale
        layers.append((W, scale, shift))
    return layers


def reference_forward(unknown, known, unknow_feats, known_feats, layers):
    """Pure-JAX reference; mirrors the kernel's bf16-input / f32-accumulate matmuls."""
    uu = jnp.sum(unknown * unknown, axis=-1, keepdims=True)           # (B, n, 1)
    kk = jnp.sum(known * known, axis=-1, keepdims=True)               # (B, m, 1)
    cross = jnp.einsum('bnd,bmd->bnm', unknown, known, precision=_HIGH)
    d2 = jnp.maximum(uu + jnp.swapaxes(kk, 1, 2) - 2.0 * cross, 0.0)  # (B, n, m)
    neg, idx = jax.lax.top_k(-d2, 3)                                  # (B, n, 3)
    dist = jnp.sqrt(jnp.maximum(-neg, 0.0))
    recip = 1.0 / (dist + 1e-8)
    w = recip / jnp.sum(recip, axis=-1, keepdims=True)                # (B, n, 3)
    # mirror the kernel's bf16 MXU operands (f32 accumulation)
    kf_b = known_feats.astype(jnp.bfloat16).astype(jnp.float32)
    w_b = w.astype(jnp.bfloat16).astype(jnp.float32)
    gathered = jnp.take_along_axis(kf_b[:, :, None, :],
                                   idx[:, None, :, :], axis=-1)       # (B, C2, n, 3)
    interp = jnp.sum(gathered * w_b[:, None, :, :], axis=-1)          # (B, C2, n)
    x = jnp.concatenate([interp, unknow_feats], axis=1)
    for (W, scale, shift) in layers:
        y = jnp.einsum('oc,bcn->bon', W.astype(jnp.bfloat16), x.astype(jnp.bfloat16),
                       preferred_element_type=jnp.float32)
        x = jnp.maximum(y * scale[None] + shift[None], 0.0)
    return x


if __name__ == "__main__":
    B, n, m = 2, 16, 8
    C1, C2 = 6, 10
    mlp = [C1 + C2, 32, 16]

    key = jax.random.PRNGKey(0)
    k1, k2, k3, k4, kp = jax.random.split(key, 5)
    unknown = jax.random.normal(k1, (B, n, 3), jnp.float32)
    known = jax.random.normal(k2, (B, m, 3), jnp.float32)
    unknow_feats = jax.random.normal(k3, (B, C1, n), jnp.float32)
    known_feats = jax.random.normal(k4, (B, C2, m), jnp.float32)

    layers = init_params(mlp, kp)

    out = pointnet_fp_forward(unknown, known, unknow_feats, known_feats, layers)
    out = jax.block_until_ready(out)

    ref = reference_forward(unknown, known, unknow_feats, known_feats, layers)
    ref = jax.block_until_ready(ref)

    assert out.shape == (B, mlp[-1], n), out.shape
    max_err = float(jnp.max(jnp.abs(out - ref)))
    assert jnp.allclose(out, ref, rtol=5e-3, atol=5e-3), max_err
    print("KERNEL_OK")
</pallas_src>

<mosaic_0001>
module attributes {stable_mosaic.version = 11 : i64} {
  func.func @kernel(%arg0: i32, %arg1: i32, %arg2: memref<1x3x128xf32, #tpu.memory_space<vmem>>, %arg3: memref<1x8x3xf32, #tpu.memory_space<vmem>>, %arg4: memref<1x6x128xbf16, #tpu.memory_space<vmem>>, %arg5: memref<1x10x8xbf16, #tpu.memory_space<vmem>>, %arg6: memref<32x10xbf16, #tpu.memory_space<vmem>>, %arg7: memref<32x6xbf16, #tpu.memory_space<vmem>>, %arg8: memref<32x1xf32, #tpu.memory_space<vmem>>, %arg9: memref<32x1xf32, #tpu.memory_space<vmem>>, %arg10: memref<16x32xbf16, #tpu.memory_space<vmem>>, %arg11: memref<16x1xf32, #tpu.memory_space<vmem>>, %arg12: memref<16x1xf32, #tpu.memory_space<vmem>>, %arg13: memref<1x16x128xf32, #tpu.memory_space<vmem>>) attributes {dimension_semantics = [#tpu.dimension_semantics<parallel>, #tpu.dimension_semantics<parallel>], iteration_bounds = array<i64: 2, 1>, scalar_prefetch = 0 : i64, scratch_operands = 0 : i64, tpu.core_type = #tpu.core_type<tc>, window_params = [{transform_indices = @transform_0, window_bounds = array<i64: 1, 3, 128>}, {transform_indices = @transform_1, window_bounds = array<i64: 1, 8, 3>}, {transform_indices = @transform_2, window_bounds = array<i64: 1, 6, 128>}, {transform_indices = @transform_3, window_bounds = array<i64: 1, 10, 8>}, {pipeline_mode = #tpu.pipeline_mode<synchronous>, transform_indices = @transform_4, window_bounds = array<i64: 32, 10>}, {pipeline_mode = #tpu.pipeline_mode<synchronous>, transform_indices = @transform_5, window_bounds = array<i64: 32, 6>}, {pipeline_mode = #tpu.pipeline_mode<synchronous>, transform_indices = @transform_6, window_bounds = array<i64: 32, 1>}, {pipeline_mode = #tpu.pipeline_mode<synchronous>, transform_indices = @transform_7, window_bounds = array<i64: 32, 1>}, {pipeline_mode = #tpu.pipeline_mode<synchronous>, transform_indices = @transform_8, window_bounds = array<i64: 16, 32>}, {pipeline_mode = #tpu.pipeline_mode<synchronous>, transform_indices = @transform_9, window_bounds = array<i64: 16, 1>}, {pipeline_mode = #tpu.pipeline_mode<synchronous>, transform_indices = @transform_10, window_bounds = array<i64: 16, 1>}, {transform_indices = @transform_11, window_bounds = array<i64: 1, 16, 128>}]} {
    %c0 = arith.constant 0 : index
    %c0_0 = arith.constant 0 : index
    %c0_1 = arith.constant 0 : index
    %0 = vector.load %arg2[%c0, %c0_0, %c0_1] : memref<1x3x128xf32, #tpu.memory_space<vmem>>, vector<1x3x128xf32>
    %1 = vector.shape_cast %0 : vector<1x3x128xf32> to vector<3x128xf32>
    %c0_2 = arith.constant 0 : index
    %c0_3 = arith.constant 0 : index
    %c0_4 = arith.constant 0 : index
    %2 = vector.load %arg3[%c0_2, %c0_3, %c0_4] : memref<1x8x3xf32, #tpu.memory_space<vmem>>, vector<1x8x3xf32>
    %3 = vector.shape_cast %2 : vector<1x8x3xf32> to vector<8x3xf32>
    %4 = vector.extract_strided_slice %3 {offsets = [0, 0], sizes = [8, 1], strides = [1, 1]} : vector<8x3xf32> to vector<8x1xf32>
    %5 = vector.extract_strided_slice %1 {offsets = [0, 0], sizes = [1, 128], strides = [1, 1]} : vector<3x128xf32> to vector<1x128xf32>
    %6 = vector.broadcast %4 : vector<8x1xf32> to vector<8x128xf32>
    %7 = vector.broadcast %5 : vector<1x128xf32> to vector<8x128xf32>
    %8 = arith.subf %6, %7 : vector<8x128xf32>
    %9 = arith.mulf %8, %8 : vector<8x128xf32>
    %10 = vector.extract_strided_slice %3 {offsets = [0, 1], sizes = [8, 1], strides = [1, 1]} : vector<8x3xf32> to vector<8x1xf32>
    %11 = vector.extract_strided_slice %1 {offsets = [1, 0], sizes = [1, 128], strides = [1, 1]} : vector<3x128xf32> to vector<1x128xf32>
    %12 = vector.broadcast %10 : vector<8x1xf32> to vector<8x128xf32>
    %13 = vector.broadcast %11 : vector<1x128xf32> to vector<8x128xf32>
    %14 = arith.subf %12, %13 : vector<8x128xf32>
    %15 = arith.mulf %14, %14 : vector<8x128xf32>
    %16 = arith.addf %9, %15 : vector<8x128xf32>
    %17 = vector.extract_strided_slice %3 {offsets = [0, 2], sizes = [8, 1], strides = [1, 1]} : vector<8x3xf32> to vector<8x1xf32>
    %18 = vector.extract_strided_slice %1 {offsets = [2, 0], sizes = [1, 128], strides = [1, 1]} : vector<3x128xf32> to vector<1x128xf32>
    %19 = vector.broadcast %17 : vector<8x1xf32> to vector<8x128xf32>
    %20 = vector.broadcast %18 : vector<1x128xf32> to vector<8x128xf32>
    %21 = arith.subf %19, %20 : vector<8x128xf32>
    %22 = arith.mulf %21, %21 : vector<8x128xf32>
    %23 = arith.addf %16, %22 : vector<8x128xf32>
    %24 = tpu.iota {dimensions = array<i32: 0>} : vector<8x128xi32>
    %25 = arith.sitofp %24 : vector<8x128xi32> to vector<8x128xf32>
    %cst = arith.constant 0.000000e+00 : f32
    %26 = vector.broadcast %cst : f32 to vector<8x128xf32>
    %cst_5 = arith.constant 0.000000e+00 : f32
    %27 = vector.broadcast %cst_5 : f32 to vector<1x128xf32>
    %cst_6 = arith.constant dense<0x7F800000> : vector<128xf32>
    %28 = vector.multi_reduction <minimumf>, %23, %cst_6 [0] : vector<8x128xf32> to vector<128xf32>
    %29 = vector.shape_cast %28 : vector<128xf32> to vector<1x128xf32>
    %30 = vector.broadcast %29 : vector<1x128xf32> to vector<8x128xf32>
    %31 = arith.cmpf ole, %23, %30 : vector<8x128xf32>
    %cst_7 = arith.constant 8.000000e+00 : f32
    %32 = vector.broadcast %cst_7 : f32 to vector<8x128xf32>
    %33 = arith.select %31, %25, %32 : vector<8x128xi1>, vector<8x128xf32>
    %cst_8 = arith.constant dense<0x7F800000> : vector<128xf32>
    %34 = vector.multi_reduction <minimumf>, %33, %cst_8 [0] : vector<8x128xf32> to vector<128xf32>
    %35 = vector.shape_cast %34 : vector<128xf32> to vector<1x128xf32>
    %36 = vector.broadcast %35 : vector<1x128xf32> to vector<8x128xf32>
    %37 = arith.cmpf oeq, %25, %36 : vector<8x128xf32>
    %38 = math.sqrt %29 : vector<1x128xf32>
    %cst_9 = arith.constant 9.99999993E-9 : f32
    %39 = vector.broadcast %cst_9 : f32 to vector<1x128xf32>
    %40 = arith.addf %38, %39 : vector<1x128xf32>
    %cst_10 = arith.constant 1.000000e+00 : f32
    %41 = vector.broadcast %cst_10 : f32 to vector<1x128xf32>
    %42 = arith.divf %41, %40 : vector<1x128xf32>
    %cst_11 = arith.constant 0.000000e+00 : f32
    %43 = vector.shape_cast %42 : vector<1x128xf32> to vector<1x128xf32>
    %44 = vector.broadcast %43 : vector<1x128xf32> to vector<8x128xf32>
    %45 = vector.broadcast %cst_11 : f32 to vector<8x128xf32>
    %46 = arith.select %37, %44, %45 : vector<8x128xi1>, vector<8x128xf32>
    %47 = arith.addf %26, %46 : vector<8x128xf32>
    %48 = arith.addf %27, %42 : vector<1x128xf32>
    %cst_12 = arith.constant 1.000000e+30 : f32
    %49 = vector.broadcast %cst_12 : f32 to vector<8x128xf32>
    %50 = arith.select %37, %49, %23 : vector<8x128xi1>, vector<8x128xf32>
    %cst_13 = arith.constant dense<0x7F800000> : vector<128xf32>
    %51 = vector.multi_reduction <minimumf>, %50, %cst_13 [0] : vector<8x128xf32> to vector<128xf32>
    %52 = vector.shape_cast %51 : vector<128xf32> to vector<1x128xf32>
    %53 = vector.broadcast %52 : vector<1x128xf32> to vector<8x128xf32>
    %54 = arith.cmpf ole, %50, %53 : vector<8x128xf32>
    %cst_14 = arith.constant 8.000000e+00 : f32
    %55 = vector.broadcast %cst_14 : f32 to vector<8x128xf32>
    %56 = arith.select %54, %25, %55 : vector<8x128xi1>, vector<8x128xf32>
    %cst_15 = arith.constant dense<0x7F800000> : vector<128xf32>
    %57 = vector.multi_reduction <minimumf>, %56, %cst_15 [0] : vector<8x128xf32> to vector<128xf32>
    %58 = vector.shape_cast %57 : vector<128xf32> to vector<1x128xf32>
    %59 = vector.broadcast %58 : vector<1x128xf32> to vector<8x128xf32>
    %60 = arith.cmpf oeq, %25, %59 : vector<8x128xf32>
    %61 = math.sqrt %52 : vector<1x128xf32>
    %cst_16 = arith.constant 9.99999993E-9 : f32
    %62 = vector.broadcast %cst_16 : f32 to vector<1x128xf32>
    %63 = arith.addf %61, %62 : vector<1x128xf32>
    %cst_17 = arith.constant 1.000000e+00 : f32
    %64 = vector.broadcast %cst_17 : f32 to vector<1x128xf32>
    %65 = arith.divf %64, %63 : vector<1x128xf32>
    %cst_18 = arith.constant 0.000000e+00 : f32
    %66 = vector.shape_cast %65 : vector<1x128xf32> to vector<1x128xf32>
    %67 = vector.broadcast %66 : vector<1x128xf32> to vector<8x128xf32>
    %68 = vector.broadcast %cst_18 : f32 to vector<8x128xf32>
    %69 = arith.select %60, %67, %68 : vector<8x128xi1>, vector<8x128xf32>
    %70 = arith.addf %47, %69 : vector<8x128xf32>
    %71 = arith.addf %48, %65 : vector<1x128xf32>
    %cst_19 = arith.constant 1.000000e+30 : f32
    %72 = vector.broadcast %cst_19 : f32 to vector<8x128xf32>
    %73 = arith.select %60, %72, %50 : vector<8x128xi1>, vector<8x128xf32>
    %cst_20 = arith.constant dense<0x7F800000> : vector<128xf32>
    %74 = vector.multi_reduction <minimumf>, %73, %cst_20 [0] : vector<8x128xf32> to vector<128xf32>
    %75 = vector.shape_cast %74 : vector<128xf32> to vector<1x128xf32>
    %76 = vector.broadcast %75 : vector<1x128xf32> to vector<8x128xf32>
    %77 = arith.cmpf ole, %73, %76 : vector<8x128xf32>
    %cst_21 = arith.constant 8.000000e+00 : f32
    %78 = vector.broadcast %cst_21 : f32 to vector<8x128xf32>
    %79 = arith.select %77, %25, %78 : vector<8x128xi1>, vector<8x128xf32>
    %cst_22 = arith.constant dense<0x7F800000> : vector<128xf32>
    %80 = vector.multi_reduction <minimumf>, %79, %cst_22 [0] : vector<8x128xf32> to vector<128xf32>
    %81 = vector.shape_cast %80 : vector<128xf32> to vector<1x128xf32>
    %82 = vector.broadcast %81 : vector<1x128xf32> to vector<8x128xf32>
    %83 = arith.cmpf oeq, %25, %82 : vector<8x128xf32>
    %84 = math.sqrt %75 : vector<1x128xf32>
    %cst_23 = arith.constant 9.99999993E-9 : f32
    %85 = vector.broadcast %cst_23 : f32 to vector<1x128xf32>
    %86 = arith.addf %84, %85 : vector<1x128xf32>
    %cst_24 = arith.constant 1.000000e+00 : f32
    %87 = vector.broadcast %cst_24 : f32 to vector<1x128xf32>
    %88 = arith.divf %87, %86 : vector<1x128xf32>
    %cst_25 = arith.constant 0.000000e+00 : f32
    %89 = vector.shape_cast %88 : vector<1x128xf32> to vector<1x128xf32>
    %90 = vector.broadcast %89 : vector<1x128xf32> to vector<8x128xf32>
    %91 = vector.broadcast %cst_25 : f32 to vector<8x128xf32>
    %92 = arith.select %83, %90, %91 : vector<8x128xi1>, vector<8x128xf32>
    %93 = arith.addf %70, %92 : vector<8x128xf32>
    %94 = arith.addf %71, %88 : vector<1x128xf32>
    %cst_26 = arith.constant 1.000000e+00 : f32
    %95 = vector.broadcast %cst_26 : f32 to vector<1x128xf32>
    %96 = arith.divf %95, %94 : vector<1x128xf32>
    %97 = vector.broadcast %96 : vector<1x128xf32> to vector<8x128xf32>
    %98 = arith.mulf %93, %97 : vector<8x128xf32>
    %99 = arith.truncf %98 : vector<8x128xf32> to vector<8x128xbf16>
    %c0_27 = arith.constant 0 : index
    %c0_28 = arith.constant 0 : index
    %c0_29 = arith.constant 0 : index
    %100 = vector.load %arg5[%c0_27, %c0_28, %c0_29] : memref<1x10x8xbf16, #tpu.memory_space<vmem>>, vector<1x10x8xbf16>
    %101 = vector.shape_cast %100 : vector<1x10x8xbf16> to vector<10x8xbf16>
    %cst_30 = arith.constant dense<0.000000e+00> : vector<10x128xf32>
    %102 = tpu.matmul %101, %99, %cst_30 {dimension_numbers = #tpu.dot_dimension_numbers<[1], [0], [0], [1], [0, 0, 1, 1], [], []>} : vector<10x8xbf16>, vector<8x128xbf16>, vector<10x128xf32> -> vector<10x128xf32>
    %c0_31 = arith.constant 0 : index
    %c0_32 = arith.constant 0 : index
    %103 = vector.load %arg6[%c0_31, %c0_32] : memref<32x10xbf16, #tpu.memory_space<vmem>>, vector<32x10xbf16>
    %c0_33 = arith.constant 0 : index
    %c0_34 = arith.constant 0 : index
    %104 = vector.load %arg7[%c0_33, %c0_34] : memref<32x6xbf16, #tpu.memory_space<vmem>>, vector<32x6xbf16>
    %c0_35 = arith.constant 0 : index
    %c0_36 = arith.constant 0 : index
    %105 = vector.load %arg8[%c0_35, %c0_36] : memref<32x1xf32, #tpu.memory_space<vmem>>, vector<32x1xf32>
    %c0_37 = arith.constant 0 : index
    %c0_38 = arith.constant 0 : index
    %106 = vector.load %arg9[%c0_37, %c0_38] : memref<32x1xf32, #tpu.memory_space<vmem>>, vector<32x1xf32>
    %107 = arith.truncf %102 : vector<10x128xf32> to vector<10x128xbf16>
    %cst_39 = arith.constant dense<0.000000e+00> : vector<32x128xf32>
    %108 = tpu.matmul %103, %107, %cst_39 {dimension_numbers = #tpu.dot_dimension_numbers<[1], [0], [0], [1], [0, 0, 1, 1], [], []>} : vector<32x10xbf16>, vector<10x128xbf16>, vector<32x128xf32> -> vector<32x128xf32>
    %c0_40 = arith.constant 0 : index
    %c0_41 = arith.constant 0 : index
    %c0_42 = arith.constant 0 : index
    %109 = vector.load %arg4[%c0_40, %c0_41, %c0_42] : memref<1x6x128xbf16, #tpu.memory_space<vmem>>, vector<1x6x128xbf16>
    %110 = vector.shape_cast %109 : vector<1x6x128xbf16> to vector<6x128xbf16>
    %cst_43 = arith.constant dense<0.000000e+00> : vector<32x128xf32>
    %111 = tpu.matmul %104, %110, %cst_43 {dimension_numbers = #tpu.dot_dimension_numbers<[1], [0], [0], [1], [0, 0, 1, 1], [], []>} : vector<32x6xbf16>, vector<6x128xbf16>, vector<32x128xf32> -> vector<32x128xf32>
    %112 = arith.addf %108, %111 : vector<32x128xf32>
    %113 = vector.broadcast %105 : vector<32x1xf32> to vector<32x128xf32>
    %114 = arith.mulf %112, %113 : vector<32x128xf32>
    %115 = vector.broadcast %106 : vector<32x1xf32> to vector<32x128xf32>
    %116 = arith.addf %114, %115 : vector<32x128xf32>
    %cst_44 = arith.constant 0.000000e+00 : f32
    %117 = vector.broadcast %cst_44 : f32 to vector<32x128xf32>
    %118 = arith.maximumf %116, %117 : vector<32x128xf32>
    %c0_45 = arith.constant 0 : index
    %c0_46 = arith.constant 0 : index
    %119 = vector.load %arg10[%c0_45, %c0_46] : memref<16x32xbf16, #tpu.memory_space<vmem>>, vector<16x32xbf16>
    %c0_47 = arith.constant 0 : index
    %c0_48 = arith.constant 0 : index
    %120 = vector.load %arg11[%c0_47, %c0_48] : memref<16x1xf32, #tpu.memory_space<vmem>>, vector<16x1xf32>
    %c0_49 = arith.constant 0 : index
    %c0_50 = arith.constant 0 : index
    %121 = vector.load %arg12[%c0_49, %c0_50] : memref<16x1xf32, #tpu.memory_space<vmem>>, vector<16x1xf32>
    %122 = arith.truncf %118 : vector<32x128xf32> to vector<32x128xbf16>
    %cst_51 = arith.constant dense<0.000000e+00> : vector<16x128xf32>
    %123 = tpu.matmul %119, %122, %cst_51 {dimension_numbers = #tpu.dot_dimension_numbers<[1], [0], [0], [1], [0, 0, 1, 1], [], []>} : vector<16x32xbf16>, vector<32x128xbf16>, vector<16x128xf32> -> vector<16x128xf32>
    %124 = vector.broadcast %120 : vector<16x1xf32> to vector<16x128xf32>
    %125 = arith.mulf %123, %124 : vector<16x128xf32>
    %126 = vector.broadcast %121 : vector<16x1xf32> to vector<16x128xf32>
    %127 = arith.addf %125, %126 : vector<16x128xf32>
    %cst_52 = arith.constant 0.000000e+00 : f32
    %128 = vector.broadcast %cst_52 : f32 to vector<16x128xf32>
    %129 = arith.maximumf %127, %128 : vector<16x128xf32>
    %c0_53 = arith.constant 0 : index
    %c0_54 = arith.constant 0 : index
    %c0_55 = arith.constant 0 : index
    %130 = vector.load %arg13[%c0_53, %c0_54, %c0_55] : memref<1x16x128xf32, #tpu.memory_space<vmem>>, vector<1x16x128xf32>
    %131 = vector.shape_cast %130 : vector<1x16x128xf32> to vector<16x128xf32>
    %132 = vector.shape_cast %129 : vector<16x128xf32> to vector<1x16x128xf32>
    tpu.vector_store %arg13[%c0_53, %c0_54, %c0_55], %132 {strides = array<i32>} : memref<1x16x128xf32, #tpu.memory_space<vmem>>, vector<1x16x128xf32>,
    return
  }
  func.func @transform_0(%arg0: i32, %arg1: i32) -> (i32, i32, i32) {
    %c0_i32 = arith.constant 0 : i32
    %c0_i32_0 = arith.constant 0 : i32
    return %arg0, %c0_i32, %arg1 : i32, i32, i32
  }
  func.func @transform_1(%arg0: i32, %arg1: i32) -> (i32, i32, i32) {
    %c0_i32 = arith.constant 0 : i32
    %c0_i32_0 = arith.constant 0 : i32
    %c0_i32_1 = arith.constant 0 : i32
    return %arg0, %c0_i32, %c0_i32_0 : i32, i32, i32
  }
  func.func @transform_2(%arg0: i32, %arg1: i32) -> (i32, i32, i32) {
    %c0_i32 = arith.constant 0 : i32
    %c0_i32_0 = arith.constant 0 : i32
    return %arg0, %c0_i32, %arg1 : i32, i32, i32
  }
  func.func @transform_3(%arg0: i32, %arg1: i32) -> (i32, i32, i32) {
    %c0_i32 = arith.constant 0 : i32
    %c0_i32_0 = arith.constant 0 : i32
    %c0_i32_1 = arith.constant 0 : i32
    return %arg0, %c0_i32, %c0_i32_0 : i32, i32, i32
  }
  func.func @transform_4(%arg0: i32, %arg1: i32) -> (i32, i32) {
    %c0_i32 = arith.constant 0 : i32
    %c0_i32_0 = arith.constant 0 : i32
    %c0_i32_1 = arith.constant 0 : i32
    return %c0_i32, %c0_i32_0 : i32, i32
  }
  func.func @transform_5(%arg0: i32, %arg1: i32) -> (i32, i32) {
    %c0_i32 = arith.constant 0 : i32
    %c0_i32_0 = arith.constant 0 : i32
    %c0_i32_1 = arith.constant 0 : i32
    return %c0_i32, %c0_i32_0 : i32, i32
  }
  func.func @transform_6(%arg0: i32, %arg1: i32) -> (i32, i32) {
    %c0_i32 = arith.constant 0 : i32
    %c0_i32_0 = arith.constant 0 : i32
    %c0_i32_1 = arith.constant 0 : i32
    return %c0_i32, %c0_i32_0 : i32, i32
  }
  func.func @transform_7(%arg0: i32, %arg1: i32) -> (i32, i32) {
    %c0_i32 = arith.constant 0 : i32
    %c0_i32_0 = arith.constant 0 : i32
    %c0_i32_1 = arith.constant 0 : i32
    return %c0_i32, %c0_i32_0 : i32, i32
  }
  func.func @transform_8(%arg0: i32, %arg1: i32) -> (i32, i32) {
    %c0_i32 = arith.constant 0 : i32
    %c0_i32_0 = arith.constant 0 : i32
    %c0_i32_1 = arith.constant 0 : i32
    return %c0_i32, %c0_i32_0 : i32, i32
  }
  func.func @transform_9(%arg0: i32, %arg1: i32) -> (i32, i32) {
    %c0_i32 = arith.constant 0 : i32
    %c0_i32_0 = arith.constant 0 : i32
    %c0_i32_1 = arith.constant 0 : i32
    return %c0_i32, %c0_i32_0 : i32, i32
  }
  func.func @transform_10(%arg0: i32, %arg1: i32) -> (i32, i32) {
    %c0_i32 = arith.constant 0 : i32
    %c0_i32_0 = arith.constant 0 : i32
    %c0_i32_1 = arith.constant 0 : i32
    return %c0_i32, %c0_i32_0 : i32, i32
  }
  func.func @transform_11(%arg0: i32, %arg1: i32) -> (i32, i32, i32) {
    %c0_i32 = arith.constant 0 : i32
    %c0_i32_0 = arith.constant 0 : i32
    return %arg0, %c0_i32, %arg1 : i32, i32, i32
  }
}

</mosaic_0001>

<llo_original>
// kernel: tpu_custom_call.1
$region0: #{tpu_custom_call.1}
  #allocation0 [shape = 'u32[]', space=smem, size = 0x4, offset = 0x4, fixed_abs, tag = 'smem constant byte address 0x4 - core index']
  #allocation1 [shape = 'u32[144,128]{1,0:T(1,128)}', space=vmem, size = 0x12000, scoped, tag = 'internal scratch']
  %s0 = inlined_call_operand.vmem [shape: f32[2,3,128], index: 0, kind: input, shape index: {}]
  %s1 = inlined_call_operand.vmem [shape: f32[2,8,3], index: 1, kind: input, shape index: {}]
  %s2 = inlined_call_operand.vmem [shape: bf16[2,6,128], index: 2, kind: input, shape index: {}]
  %s3 = inlined_call_operand.vmem [shape: bf16[2,10,8], index: 3, kind: input, shape index: {}]
  %s4 = inlined_call_operand.vmem [shape: bf16[32,10], index: 4, kind: input, shape index: {}]
  %s5 = inlined_call_operand.vmem [shape: bf16[32,6], index: 5, kind: input, shape index: {}]
  %s6 = inlined_call_operand.vmem [shape: f32[32,1], index: 6, kind: input, shape index: {}]
  %s7 = inlined_call_operand.vmem [shape: f32[32,1], index: 7, kind: input, shape index: {}]
  %s8 = inlined_call_operand.vmem [shape: bf16[16,32], index: 8, kind: input, shape index: {}]
  %s9 = inlined_call_operand.vmem [shape: f32[16,1], index: 9, kind: input, shape index: {}]
  %s10 = inlined_call_operand.vmem [shape: f32[16,1], index: 10, kind: input, shape index: {}]
  %s11 = inlined_call_operand.hbm [shape: f32[2,16,128], index: 11, kind: output, shape index: {}]
  %s12 = sld [smem:[#allocation0]]
  $region77: #{tpu_custom_call.1} parent=0
    _
  %s14 = ssub.s32 1, %s12
  %s15 = scalar_select 0, %s14, %s12
  $region1: #{tpu_custom_call.1} parent=0
    #allocation2 [shape = 'u8[16384]{0}', space=vmem, size = 0x4000, scoped, tag = 'output window, operand 0']
    #allocation3 [shape = 's32[2]{0}', space=sflag, size = 0x8, scoped, tag = 'scoped memory for tpu_custom_call.1']
    %16 = vsyncpa [#allocation3], 0
    %s17 = scalar_lea.sflag [#allocation3], 1
    %18 = vsyncpa %s17, 0
    loop: start=0, step=1, limit=4
    $region2: #{tpu_custom_call.1} parent=1 // loop_pre_header
      _
    $region3: #{tpu_custom_call.1} parent=1 // loop_header
      %s20 = sphi 0, %s24
      %p21 = scmp.ge.s32.totalorder %s20, 4
      %s27 = sphi 0, %s39
      %s28 = sphi 0, %s35
      %s29 = sphi 0, %s27
      %s30 = sphi 0, %s28
      %s31 = sphi 0, %s29
      %s32 = sphi 0, %s30
      %s44 = sphi 0, %s46
      %s47 = sphi 0, %s44
      %s48 = sphi 0, %s47
      %s64 = sphi 0, %s48
      %s70 = sphi 0, %s72
      %s73 = sphi 0, %s70
      %s74 = sphi 0, %s73
      %s90 = sphi 0, %s74
      %s98 = sphi 0, %s100
      %s101 = sphi 0, %s98
      %s102 = sphi 0, %s101
      %s118 = sphi 0, %s102
      %s124 = sphi 0, %s126
      %s127 = sphi 0, %s124
      %s128 = sphi 0, %s127
      %s144 = sphi 0, %s128
      %s148 = sphi 0, %s148
      %s150 = sphi 0, %s148
      %s151 = sphi 0, %s150
      %s165 = sphi 0, %s151
      %s169 = sphi 0, %s169
      %s171 = sphi 0, %s169
      %s172 = sphi 0, %s171
      %s186 = sphi 0, %s172
      %s190 = sphi 0, %s190
      %s192 = sphi 0, %s190
      %s193 = sphi 0, %s192
      %s207 = sphi 0, %s193
      %s211 = sphi 0, %s211
      %s213 = sphi 0, %s211
      %s214 = sphi 0, %s213
      %s228 = sphi 0, %s214
      %s232 = sphi 0, %s232
      %s234 = sphi 0, %s232
      %s235 = sphi 0, %s234
      %s249 = sphi 0, %s235
      %s253 = sphi 0, %s253
      %s255 = sphi 0, %s253
      %s256 = sphi 0, %s255
      %s270 = sphi 0, %s256
      %s274 = sphi 0, %s274
      %s276 = sphi 0, %s274
      %s277 = sphi 0, %s276
      %s291 = sphi 0, %s277
      %s299 = sphi 0, %s301
      %s302 = sphi 0, %s299
      %s303 = sphi 0, %s302
      %s319 = sphi 0, %s303
    $region4: #{tpu_custom_call.1} parent=1 // loop_header_branch
      %23 = sbr.rel (%p21) target = $region8
    $region5: #{tpu_custom_call.1} parent=1 // loop_body
      %s25 = ssub.s32 %s20, 1
      %s26 = ssub.s32 %s20, 2
      %s33 = sadd.s32 1, %s28
      %p34 = scmp.ge.s32.totalorder %s33, 1
      %s35 = scalar_select %p34, 0, %s33
      %s36 = sadd.s32 1, %s27
      %s37 = scalar_select %p34, %s36, %s27
      %p38 = scmp.ge.s32.totalorder %s37, 2
      %s39 = scalar_select %p38, 0, %s37
      %s40 = ssub.s32 %s27, %s39
      %s41 = ssub.s32 %s28, %s35
      %s42 = sor.u32 %s40, %s41
      %p43 = scmp.eq.s32.totalorder %s42, 0
      %s45 = sadd.s32 %s44, 1
      %s46 = scalar_select %p43, %s44, %s45
      %p49 = pneg %p43
      %p50 = scmp.eq.s32.totalorder %s20, 1
      %p51 = por %p49, %p50
      %p52 = scmp.ne.s32.totalorder %s44, %s47
      %p53 = scmp.eq.s32.totalorder %s20, 0
      %p54 = por %p52, %p53
      %p55 = scmp.ne.s32.totalorder %s44, %s47
      %p56 = scmp.eq.s32.totalorder %s25, 1
      %p57 = por %p55, %p56
      %p58 = scmp.ne.s32.totalorder %s47, %s48
      %p59 = scmp.eq.s32.totalorder %s25, 0
      %p60 = por %p58, %p59
      %p61 = scmp.ne.s32.totalorder %s47, %s48
      %p62 = scmp.eq.s32.totalorder %s26, 1
      %p63 = por %p61, %p62
      %p65 = scmp.ne.s32.totalorder %s48, %s64
      %p66 = scmp.eq.s32.totalorder %s26, 0
      %p67 = por %p65, %p66
      %s68 = ssub.s32 %s27, %s39
      %p69 = scmp.eq.s32.totalorder %s68, 0
      %s71 = sadd.s32 %s70, 1
      %s72 = scalar_select %p69, %s70, %s71
      %p75 = pneg %p69
      %p76 = scmp.eq.s32.totalorder %s20, 1
      %p77 = por %p75, %p76
      %p78 = scmp.ne.s32.totalorder %s70, %s73
      %p79 = scmp.eq.s32.totalorder %s20, 0
      %p80 = por %p78, %p79
      %p81 = scmp.ne.s32.totalorder %s70, %s73
      %p82 = scmp.eq.s32.totalorder %s25, 1
      %p83 = por %p81, %p82
      %p84 = scmp.ne.s32.totalorder %s73, %s74
      %p85 = scmp.eq.s32.totalorder %s25, 0
      %p86 = por %p84, %p85
      %p87 = scmp.ne.s32.totalorder %s73, %s74
      %p88 = scmp.eq.s32.totalorder %s26, 1
      %p89 = por %p87, %p88
      %p91 = scmp.ne.s32.totalorder %s74, %s90
      %p92 = scmp.eq.s32.totalorder %s26, 0
      %p93 = por %p91, %p92
      %s94 = ssub.s32 %s27, %s39
      %s95 = ssub.s32 %s28, %s35
      %s96 = sor.u32 %s94, %s95
      %p97 = scmp.eq.s32.totalorder %s96, 0
      %s99 = sadd.s32 %s98, 1
      %s100 = scalar_select %p97, %s98, %s99
      %p103 = pneg %p97
      %p104 = scmp.eq.s32.totalorder %s20, 1
      %p105 = por %p103, %p104
      %p106 = scmp.ne.s32.totalorder %s98, %s101
      %p107 = scmp.eq.s32.totalorder %s20, 0
      %p108 = por %p106, %p107
      %p109 = scmp.ne.s32.totalorder %s98, %s101
      %p110 = scmp.eq.s32.totalorder %s25, 1
      %p111 = por %p109, %p110
      %p112 = scmp.ne.s32.totalorder %s101, %s102
      %p113 = scmp.eq.s32.totalorder %s25, 0
      %p114 = por %p112, %p113
      %p115 = scmp.ne.s32.totalorder %s101, %s102
      %p116 = scmp.eq.s32.totalorder %s26, 1
      %p117 = por %p115, %p116
      %p119 = scmp.ne.s32.totalorder %s102, %s118
      %p120 = scmp.eq.s32.totalorder %s26, 0
      %p121 = por %p119, %p120
      %s122 = ssub.s32 %s27, %s39
      %p123 = scmp.eq.s32.totalorder %s122, 0
      %s125 = sadd.s32 %s124, 1
      %s126 = scalar_select %p123, %s124, %s125
      %p129 = pneg %p123
      %p130 = scmp.eq.s32.totalorder %s20, 1
      %p131 = por %p129, %p130
      %p132 = scmp.ne.s32.totalorder %s124, %s127
      %p133 = scmp.eq.s32.totalorder %s20, 0
      %p134 = por %p132, %p133
      %p135 = scmp.ne.s32.totalorder %s124, %s127
      %p136 = scmp.eq.s32.totalorder %s25, 1
      %p137 = por %p135, %p136
      %p138 = scmp.ne.s32.totalorder %s127, %s128
      %p139 = scmp.eq.s32.totalorder %s25, 0
      %p140 = por %p138, %p139
      %p141 = scmp.ne.s32.totalorder %s127, %s128
      %p142 = scmp.eq.s32.totalorder %s26, 1
      %p143 = por %p141, %p142
      %p145 = scmp.ne.s32.totalorder %s128, %s144
      %p146 = scmp.eq.s32.totalorder %s26, 0
      %p147 = por %p145, %p146
      %s149 = sadd.s32 %s148, 1
      %p152 = scmp.eq.s32.totalorder %s20, 1
      %p153 = scmp.ne.s32.totalorder %s148, %s150
      %p154 = scmp.eq.s32.totalorder %s20, 0
      %p155 = por %p153, %p154
      %p156 = scmp.ne.s32.totalorder %s148, %s150
      %p157 = scmp.eq.s32.totalorder %s25, 1
      %p158 = por %p156, %p157
      %p159 = scmp.ne.s32.totalorder %s150, %s151
      %p160 = scmp.eq.s32.totalorder %s25, 0
      %p161 = por %p159, %p160
      %p162 = scmp.ne.s32.totalorder %s150, %s151
      %p163 = scmp.eq.s32.totalorder %s26, 1
      %p164 = por %p162, %p163
      %p166 = scmp.ne.s32.totalorder %s151, %s165
      %p167 = scmp.eq.s32.totalorder %s26, 0
      %p168 = por %p166, %p167
      %s170 = sadd.s32 %s169, 1
      %p173 = scmp.eq.s32.totalorder %s20, 1
      %p174 = scmp.ne.s32.totalorder %s169, %s171
      %p175 = scmp.eq.s32.totalorder %s20, 0
      %p176 = por %p174, %p175
      %p177 = scmp.ne.s32.totalorder %s169, %s171
      %p178 = scmp.eq.s32.totalorder %s25, 1
      %p179 = por %p177, %p178
      %p180 = scmp.ne.s32.totalorder %s171, %s172
      %p181 = scmp.eq.s32.totalorder %s25, 0
      %p182 = por %p180, %p181
      %p183 = scmp.ne.s32.totalorder %s171, %s172
      %p184 = scmp.eq.s32.totalorder %s26, 1
      %p185 = por %p183, %p184
      %p187 = scmp.ne.s32.totalorder %s172, %s186
      %p188 = scmp.eq.s32.totalorder %s26, 0
      %p189 = por %p187, %p188
      %s191 = sadd.s32 %s190, 1
      %p194 = scmp.eq.s32.totalorder %s20, 1
      %p195 = scmp.ne.s32.totalorder %s190, %s192
      %p196 = scmp.eq.s32.totalorder %s20, 0
      %p197 = por %p195, %p196
      %p198 = scmp.ne.s32.totalorder %s190, %s192
      %p199 = scmp.eq.s32.totalorder %s25, 1
      %p200 = por %p198, %p199
      %p201 = scmp.ne.s32.totalorder %s192, %s193
      %p202 = scmp.eq.s32.totalorder %s25, 0
      %p203 = por %p201, %p202
      %p204 = scmp.ne.s32.totalorder %s192, %s193
      %p205 = scmp.eq.s32.totalorder %s26, 1
      %p206 = por %p204, %p205
      %p208 = scmp.ne.s32.totalorder %s193, %s207
      %p209 = scmp.eq.s32.totalorder %s26, 0
      %p210 = por %p208, %p209
      %s212 = sadd.s32 %s211, 1
      %p215 = scmp.eq.s32.totalorder %s20, 1
      %p216 = scmp.ne.s32.totalorder %s211, %s213
      %p217 = scmp.eq.s32.totalorder %s20, 0
      %p218 = por %p216, %p217
      %p219 = scmp.ne.s32.totalorder %s211, %s213
      %p220 = scmp.eq.s32.totalorder %s25, 1
      %p221 = por %p219, %p220
      %p222 = scmp.ne.s32.totalorder %s213, %s214
      %p223 = scmp.eq.s32.totalorder %s25, 0
      %p224 = por %p222, %p223
      %p225 = scmp.ne.s32.totalorder %s213, %s214
      %p226 = scmp.eq.s32.totalorder %s26, 1
      %p227 = por %p225, %p226
      %p229 = scmp.ne.s32.totalorder %s214, %s228
      %p230 = scmp.eq.s32.totalorder %s26, 0
      %p231 = por %p229, %p230
      %s233 = sadd.s32 %s232, 1
      %p236 = scmp.eq.s32.totalorder %s20, 1
      %p237 = scmp.ne.s32.totalorder %s232, %s234
      %p238 = scmp.eq.s32.totalorder %s20, 0
      %p239 = por %p237, %p238
      %p240 = scmp.ne.s32.totalorder %s232, %s234
      %p241 = scmp.eq.s32.totalorder %s25, 1
      %p242 = por %p240, %p241
      %p243 = scmp.ne.s32.totalorder %s234, %s235
      %p244 = scmp.eq.s32.totalorder %s25, 0
      %p245 = por %p243, %p244
      %p246 = scmp.ne.s32.totalorder %s234, %s235
      %p247 = scmp.eq.s32.totalorder %s26, 1
      %p248 = por %p246, %p247
      %p250 = scmp.ne.s32.totalorder %s235, %s249
      %p251 = scmp.eq.s32.totalorder %s26, 0
      %p252 = por %p250, %p251
      %s254 = sadd.s32 %s253, 1
      %p257 = scmp.eq.s32.totalorder %s20, 1
      %p258 = scmp.ne.s32.totalorder %s253, %s255
      %p259 = scmp.eq.s32.totalorder %s20, 0
      %p260 = por %p258, %p259
      %p261 = scmp.ne.s32.totalorder %s253, %s255
      %p262 = scmp.eq.s32.totalorder %s25, 1
      %p263 = por %p261, %p262
      %p264 = scmp.ne.s32.totalorder %s255, %s256
      %p265 = scmp.eq.s32.totalorder %s25, 0
      %p266 = por %p264, %p265
      %p267 = scmp.ne.s32.totalorder %s255, %s256
      %p268 = scmp.eq.s32.totalorder %s26, 1
      %p269 = por %p267, %p268
      %p271 = scmp.ne.s32.totalorder %s256, %s270
      %p272 = scmp.eq.s32.totalorder %s26, 0
      %p273 = por %p271, %p272
      %s275 = sadd.s32 %s274, 1
      %p278 = scmp.eq.s32.totalorder %s20, 1
      %p279 = scmp.ne.s32.totalorder %s274, %s276
      %p280 = scmp.eq.s32.totalorder %s20, 0
      %p281 = por %p279, %p280
      %p282 = scmp.ne.s32.totalorder %s274, %s276
      %p283 = scmp.eq.s32.totalorder %s25, 1
      %p284 = por %p282, %p283
      %p285 = scmp.ne.s32.totalorder %s276, %s277
      %p286 = scmp.eq.s32.totalorder %s25, 0
      %p287 = por %p285, %p286
      %p288 = scmp.ne.s32.totalorder %s276, %s277
      %p289 = scmp.eq.s32.totalorder %s26, 1
      %p290 = por %p288, %p289
      %p292 = scmp.ne.s32.totalorder %s277, %s291
      %p293 = scmp.eq.s32.totalorder %s26, 0
      %p294 = por %p292, %p293
      %s295 = ssub.s32 %s27, %s39
      %s296 = ssub.s32 %s28, %s35
      %s297 = sor.u32 %s295, %s296
      %p298 = scmp.eq.s32.totalorder %s297, 0
      %s300 = sadd.s32 %s299, 1
      %s301 = scalar_select %p298, %s299, %s300
      %p304 = pneg %p298
      %p305 = scmp.eq.s32.totalorder %s20, 1
      %p306 = por %p304, %p305
      %p307 = scmp.ne.s32.totalorder %s299, %s302
      %p308 = scmp.eq.s32.totalorder %s20, 0
      %p309 = por %p307, %p308
      %p310 = scmp.ne.s32.totalorder %s299, %s302
      %p311 = scmp.eq.s32.totalorder %s25, 1
      %p312 = por %p310, %p311
      %p313 = scmp.ne.s32.totalorder %s302, %s303
      %p314 = scmp.eq.s32.totalorder %s25, 0
      %p315 = por %p313, %p314
      %p316 = scmp.ne.s32.totalorder %s302, %s303
      %p317 = scmp.eq.s32.totalorder %s26, 1
      %p318 = por %p316, %p317
      %p320 = scmp.ne.s32.totalorder %s303, %s319
      %p321 = scmp.eq.s32.totalorder %s26, 0
      %p322 = por %p320, %p321
      %p323 = scmp.le.s32.totalorder 1, %s20
      %p324 = scmp.lt.s32.totalorder %s20, 3
      %p325 = pnand %p323, %p324
      %p326 = pneg %p325
      // Predicated region
      $region9: #{tpu_custom_call.1} parent=5 // pred_check
        _
      $region10: #{tpu_custom_call.1} parent=5 // pred_check_branch
        %328 = sbr.rel (%p325) target = $region12
      $region11: #{tpu_custom_call.1} parent=5 // pred_region
        %s329 = ssub.s32 %s20, 1
        // Predicated region
        $region13: #{tpu_custom_call.1} parent=11 // pred_check
          %p330 = pneg %p161
        $region14: #{tpu_custom_call.1} parent=11 // pred_check_branch
          %332 = sbr.rel (%p330) target = $region16
        $region15: #{tpu_custom_call.1} parent=11 // pred_region
          _
        $region16: #{tpu_custom_call.1} parent=11 // pred_fallthru
          _
        // Predicated region
        $region17: #{tpu_custom_call.1} parent=11 // pred_check
          %p333 = pneg %p182
        $region18: #{tpu_custom_call.1} parent=11 // pred_check_branch
          %335 = sbr.rel (%p333) target = $region20
        $region19: #{tpu_custom_call.1} parent=11 // pred_region
          _
        $region20: #{tpu_custom_call.1} parent=11 // pred_fallthru
          _
        // Predicated region
        $region21: #{tpu_custom_call.1} parent=11 // pred_check
          %p336 = pneg %p203
        $region22: #{tpu_custom_call.1} parent=11 // pred_check_branch
          %338 = sbr.rel (%p336) target = $region24
        $region23: #{tpu_custom_call.1} parent=11 // pred_region
          _
        $region24: #{tpu_custom_call.1} parent=11 // pred_fallthru
          _
        // Predicated region
        $region25: #{tpu_custom_call.1} parent=11 // pred_check
          %p339 = pneg %p224
        $region26: #{tpu_custom_call.1} parent=11 // pred_check_branch
          %341 = sbr.rel (%p339) target = $region28
        $region27: #{tpu_custom_call.1} parent=11 // pred_region
          _
        $region28: #{tpu_custom_call.1} parent=11 // pred_fallthru
          _
        // Predicated region
        $region29: #{tpu_custom_call.1} parent=11 // pred_check
          %p342 = pneg %p245
        $region30: #{tpu_custom_call.1} parent=11 // pred_check_branch
          %344 = sbr.rel (%p342) target = $region32
        $region31: #{tpu_custom_call.1} parent=11 // pred_region
          _
        $region32: #{tpu_custom_call.1} parent=11 // pred_fallthru
          _
        // Predicated region
        $region33: #{tpu_custom_call.1} parent=11 // pred_check
          %p345 = pneg %p266
        $region34: #{tpu_custom_call.1} parent=11 // pred_check_branch
          %347 = sbr.rel (%p345) target = $region36
        $region35: #{tpu_custom_call.1} parent=11 // pred_region
          _
        $region36: #{tpu_custom_call.1} parent=11 // pred_fallthru
          _
        // Predicated region
        $region37: #{tpu_custom_call.1} parent=11 // pred_check
          %p348 = pneg %p287
        $region38: #{tpu_custom_call.1} parent=11 // pred_check_branch
          %350 = sbr.rel (%p348) target = $region40
        $region39: #{tpu_custom_call.1} parent=11 // pred_region
          _
        $region40: #{tpu_custom_call.1} parent=11 // pred_fallthru
          _
      $region12: #{tpu_custom_call.1} parent=5 // pred_fallthru
        _
      %p351 = scmp.lt.s32.totalorder %s20, 2
      // Predicated region
      $region41: #{tpu_custom_call.1} parent=5 // pred_check
        %p352 = pneg %p351
      $region42: #{tpu_custom_call.1} parent=5 // pred_check_branch
        %354 = sbr.rel (%p352) target = $region44
      $region43: #{tpu_custom_call.1} parent=5 // pred_region
        // Predicated region
        $region45: #{tpu_custom_call.1} parent=43 // pred_check
          %p355 = pneg %p54
        $region46: #{tpu_custom_call.1} parent=43 // pred_check_branch
          %357 = sbr.rel (%p355) target = $region48
        $region47: #{tpu_custom_call.1} parent=43 // pred_region
          %p358 = scmp.lt.s32.totalorder %s27, 1
          %s359 = scalar_select %p358, %s27, 1
          %p360 = scmp.lt.s32.totalorder %s28, 0
          %s361 = scalar_select %p360, %s28, 0
          %s362 = sadd.s32 %s361, %s359
          %s363 = smul.addr %s362, 4
          %s364 = scalar_lea.vmem %s0, %s363
        $region48: #{tpu_custom_call.1} parent=43 // pred_fallthru
          _
        // Predicated region
        $region49: #{tpu_custom_call.1} parent=43 // pred_check
          %p365 = pneg %p80
        $region50: #{tpu_custom_call.1} parent=43 // pred_check_branch
          %367 = sbr.rel (%p365) target = $region52
        $region51: #{tpu_custom_call.1} parent=43 // pred_region
          %p368 = scmp.lt.s32.totalorder %s27, 1
          %s369 = scalar_select %p368, %s27, 1
          %s370 = smul.addr %s369, 8
          %s371 = scalar_lea.vmem %s1, %s370
        $region52: #{tpu_custom_call.1} parent=43 // pred_fallthru
          _
        // Predicated region
        $region53: #{tpu_custom_call.1} parent=43 // pred_check
          %p372 = pneg %p108
        $region54: #{tpu_custom_call.1} parent=43 // pred_check_branch
          %374 = sbr.rel (%p372) target = $region56
        $region55: #{tpu_custom_call.1} parent=43 // pred_region
          %p375 = scmp.lt.s32.totalorder %s27, 1
          %s376 = scalar_select %p375, %s27, 1
          %p377 = scmp.lt.s32.totalorder %s28, 0
          %s378 = scalar_select %p377, %s28, 0
          %s379 = sadd.s32 %s378, %s376
          %s380 = smul.addr %s379, 4
          %s381 = scalar_lea.vmem %s2, %s380
        $region56: #{tpu_custom_call.1} parent=43 // pred_fallthru
          _
        // Predicated region
        $region57: #{tpu_custom_call.1} parent=43 // pred_check
          %p382 = pneg %p134
        $region58: #{tpu_custom_call.1} parent=43 // pred_check_branch
          %384 = sbr.rel (%p382) target = $region60
        $region59: #{tpu_custom_call.1} parent=43 // pred_region
          %p385 = scmp.lt.s32.totalorder %s27, 1
          %s386 = scalar_select %p385, %s27, 1
          %s387 = smul.addr %s386, 2
          %s388 = smul.addr %s387, 4
          %s389 = scalar_lea.vmem %s3, %s388
        $region60: #{tpu_custom_call.1} parent=43 // pred_fallthru
          _
      $region44: #{tpu_custom_call.1} parent=5 // pred_fallthru
        _
      %p390 = scmp.le.s32.totalorder 1, %s20
      %p391 = scmp.lt.s32.totalorder %s20, 3
      %p392 = pnand %p390, %p391
      %p393 = pneg %p392
      // Predicated region
      $region61: #{tpu_custom_call.1} parent=5 // pred_check
        _
      $region62: #{tpu_custom_call.1} parent=5 // pred_check_branch
        %395 = sbr.rel (%p392) target = $region64
      $region63: #{tpu_custom_call.1} parent=5 // pred_region
        %s396 = ssub.s32 %s20, 1
        %p397 = scmp.lt.s32.totalorder %s29, 1
        %s398 = scalar_select %p397, %s29, 1
        %p399 = scmp.lt.s32.totalorder %s30, 0
        %s400 = scalar_select %p399, %s30, 0
        %s401 = sadd.s32 %s400, %s398
        %s402 = smul.addr %s401, 4
        %s403 = scalar_lea.vmem %s0, %s402
        %p404 = pneg %p60
        %p405 = pneg %p57
        %p406 = scmp.lt.s32.totalorder %s29, 1
        %s407 = scalar_select %p406, %s29, 1
        %s408 = smul.addr %s407, 8
        %s409 = scalar_lea.vmem %s1, %s408
        %p410 = pneg %p86
        %p411 = pneg %p83
        %p412 = scmp.lt.s32.totalorder %s29, 1
        %s413 = scalar_select %p412, %s29, 1
        %p414 = scmp.lt.s32.totalorder %s30, 0
        %s415 = scalar_select %p414, %s30, 0
        %s416 = sadd.s32 %s415, %s413
        %s417 = smul.addr %s416, 4
        %s418 = scalar_lea.vmem %s2, %s417
        %p419 = pneg %p114
        %p420 = pneg %p111
        %p421 = scmp.lt.s32.totalorder %s29, 1
        %s422 = scalar_select %p421, %s29, 1
        %s423 = smul.addr %s422, 2
        %s424 = smul.addr %s423, 4
        %s425 = scalar_lea.vmem %s3, %s424
        %p426 = pneg %p140
        %p427 = pneg %p137
        %p428 = pneg %p161
        %p429 = pneg %p158
        %p430 = pneg %p182
        %p431 = pneg %p179
        %p432 = pneg %p203
        %p433 = pneg %p200
        %p434 = pneg %p224
        %p435 = pneg %p221
        %p436 = pneg %p245
        %p437 = pneg %p242
        %p438 = pneg %p266
        %p439 = pneg %p263
        %p440 = pneg %p287
        %p441 = pneg %p284
        %p442 = pneg %p315
        %p443 = pneg %p312
        %s444 = sand.u32 %s302, 1
        %s445 = scalar_lea.sflag [#allocation3], %s444
        %s446 = sand.u32 %s302, 1
        %s447 = smul.addr %s446, 16
        %s448 = scalar_lea.vmem [#allocation2], %s447
        %p449 = scmp.lt.s32.totalorder %s29, 1
        %s450 = scalar_select %p449, %s29, 1
        %p451 = scmp.lt.s32.totalorder %s30, 0
        %s452 = scalar_select %p451, %s30, 0
        %s453 = sadd.s32 %s452, %s450
        %s454 = smul.addr %s453, 4
        %s455 = scalar_lea.vmem %s0, %s454
        %p456 = scmp.lt.s32.totalorder %s29, 1
        %s457 = scalar_select %p456, %s29, 1
        %s458 = smul.addr %s457, 8
        %s459 = scalar_lea.vmem %s1, %s458
        %p460 = scmp.lt.s32.totalorder %s29, 1
        %s461 = scalar_select %p460, %s29, 1
        %p462 = scmp.lt.s32.totalorder %s30, 0
        %s463 = scalar_select %p462, %s30, 0
        %s464 = sadd.s32 %s463, %s461
        %s465 = smul.addr %s464, 4
        %s466 = scalar_lea.vmem %s2, %s465
        %p467 = scmp.lt.s32.totalorder %s29, 1
        %s468 = scalar_select %p467, %s29, 1
        %s469 = smul.addr %s468, 2
        %s470 = smul.addr %s469, 4
        %s471 = scalar_lea.vmem %s3, %s470
        %v473 = vld [vmem:[%s455] sm:$0x7]
        %v474 = vld [vmem:[%s459] sm:$0xff]
        %476 = vset.pattern.permute.xlu0 0
        %477 = vperm.xlu0 %476, %v474
        %v478 = vpop.permute.xlu0 %477
        %v480 = vlaneseq
        %v481 = vshrl.u32 %v480, 7
        %v482 = vsub.s32 0, %v481
        %v483 = vrot.slane %v473, %v482
        %v484 = vsub.f32 %v478, %v483
        %v485 = vmul.f32 %v484, %v484
        %486 = vset.pattern.permute.xlu0 1
        %487 = vperm.xlu0 %486, %v474
        %v488 = vpop.permute.xlu0 %487
        %v490 = vlaneseq
        %v491 = vshrl.u32 %v490, 7
        %v492 = vsub.s32 1, %v491
        %v493 = vrot.slane %v473, %v492
        %v494 = vsub.f32 %v488, %v493
        %v495 = vmul.f32 %v494, %v494
        %v496 = vadd.f32 %v485, %v495
        %497 = vset.pattern.permute.xlu0 2
        %498 = vperm.xlu0 %497, %v474
        %v499 = vpop.permute.xlu0 %498
        %v501 = vlaneseq
        %v502 = vshrl.u32 %v501, 7
        %v503 = vsub.s32 2, %v502
        %v504 = vrot.slane %v473, %v503
        %v505 = vsub.f32 %v499, %v504
        %v506 = vmul.f32 %v505, %v505
        %v507 = vadd.f32 %v496, %v506
        %v508 = vlaneseq
        %v509 = vshrl.u32 %v508, 7
        %v510 = vcvt.s32.f32 %v509
        %v511 = vrot.slane %v507, 4
        %v512 = vmin.f32 %v507, %v511
        %v513 = vrot.slane %v512, 2
        %v514 = vmin.f32 %v512, %v513
        %v515 = vrot.slane %v514, 1
        %v516 = vmin.f32 %v514, %v515
        %vm517 = vcmp.le.f32.partialorder %v507, %v516
        %v518 = vsel %vm517, %v510, 8.0
        %v519 = vrot.slane %v518, 4
        %v520 = vmin.f32 %v518, %v519
        %v521 = vrot.slane %v520, 2
        %v522 = vmin.f32 %v520, %v521
        %v523 = vrot.slane %v522, 1
        %v524 = vmin.f32 %v522, %v523
        %vm525 = vcmp.eq.f32.partialorder %v510, %v524
        %v526 = vrsqrt.pop %v516
        %v527 = vmul.f32 %v516, %v526
        %vm528 = vcmp.eq.f32.partialorder %v516, inf
        %v529 = vsel %vm528, %v516, %v527
        %vm530 = vcmp.eq.f32.partialorder %v516, 0.0
        %v531 = vand.u32 %v516, 2147483648
        %v532 = vsel %vm530, %v531, %v529
        %v533 = vadd.f32 %v532, 1e-08
        %v534 = vrcp.pop %v533
        %v535 = vmul.f32 1.0, %v534
        %v536 = vsel %vm525, %v535, 0.0
        %v537 = vadd.f32 %v536, 0.0
        %v538 = vadd.f32 %v535, 0.0
        %v539 = vsel %vm525, 1e+30, %v507
        %v540 = vrot.slane %v539, 4
        %v541 = vmin.f32 %v539, %v540
        %v542 = vrot.slane %v541, 2
        %v543 = vmin.f32 %v541, %v542
        %v544 = vrot.slane %v543, 1
        %v545 = vmin.f32 %v543, %v544
        %vm546 = vcmp.le.f32.partialorder %v539, %v545
        %v547 = vsel %vm546, %v510, 8.0
        %v548 = vrot.slane %v547, 4
        %v549 = vmin.f32 %v547, %v548
        %v550 = vrot.slane %v549, 2
        %v551 = vmin.f32 %v549, %v550
        %v552 = vrot.slane %v551, 1
        %v553 = vmin.f32 %v551, %v552
        %vm554 = vcmp.eq.f32.partialorder %v510, %v553
        %v555 = vrsqrt.pop %v545
        %v556 = vmul.f32 %v545, %v555
        %vm557 = vcmp.eq.f32.partialorder %v545, inf
        %v558 = vsel %vm557, %v545, %v556
        %vm559 = vcmp.eq.f32.partialorder %v545, 0.0
        %v560 = vand.u32 %v545, 2147483648
        %v561 = vsel %vm559, %v560, %v558
        %v562 = vadd.f32 %v561, 1e-08
        %v563 = vrcp.pop %v562
        %v564 = vmul.f32 1.0, %v563
        %v565 = vsel %vm554, %v564, 0.0
        %v566 = vadd.f32 %v537, %v565
        %v567 = vadd.f32 %v538, %v564
        %v568 = vsel %vm554, 1e+30, %v539
        %v569 = vrot.slane %v568, 4
        %v570 = vmin.f32 %v568, %v569
        %v571 = vrot.slane %v570, 2
        %v572 = vmin.f32 %v570, %v571
        %v573 = vrot.slane %v572, 1
        %v574 = vmin.f32 %v572, %v573
        %vm575 = vcmp.le.f32.partialorder %v568, %v574
        %v576 = vsel %vm575, %v510, 8.0
        %v577 = vrot.slane %v576, 4
        %v578 = vmin.f32 %v576, %v577
        %v579 = vrot.slane %v578, 2
        %v580 = vmin.f32 %v578, %v579
        %v581 = vrot.slane %v580, 1
        %v582 = vmin.f32 %v580, %v581
        %vm583 = vcmp.eq.f32.partialorder %v510, %v582
        %v584 = vrsqrt.pop %v574
        %v585 = vmul.f32 %v574, %v584
        %vm586 = vcmp.eq.f32.partialorder %v574, inf
        %v587 = vsel %vm586, %v574, %v585
        %vm588 = vcmp.eq.f32.partialorder %v574, 0.0
        %v589 = vand.u32 %v574, 2147483648
        %v590 = vsel %vm588, %v589, %v587
        %v591 = vadd.f32 %v590, 1e-08
        %v592 = vrcp.pop %v591
        %v593 = vmul.f32 1.0, %v592
        %v594 = vsel %vm583, %v593, 0.0
        %v595 = vadd.f32 %v566, %v594
        %v596 = vadd.f32 %v567, %v593
        %v597 = vrcp.pop %v596
        %v598 = vmul.f32 1.0, %v597
        %v599 = vmul.f32 %v595, %v598
        %v600 = vpack.c.bf16 %v599, %v599
        %v601 = vld [vmem:[%s471] sm:$0xf]
        %v602 = vld [vmem:[%s471 + $0x4] sm:$0x1]
        %v605 = vunpack.c.l.b16 %v601
        %v606 = vunpack.c.l.b16 %v602
        %v607 = vpack.c.b16 %v606, %v605
        %vm608 = vcmask 64512
        %v610 = vsel %vm608, %v607, 0
        %vm612 = vcmask 1043456
        %v614 = vsel %vm612, %v600, 0
        %616 = vmatprep.subr.bf16.mxu0 0
        %617 = vmatpush1.bf16.msra.mxu0 %v614
        %618 = vmatprep.subr.bf16.mxu0 0
        %619 = vmatpush1.bf16.msra.mxu0 0
        %620 = vmatprep.subr.bf16.mxu0 0
        %621 = vmatpush1.bf16.msra.mxu0 0
        %622 = vmatprep.subr.bf16.mxu0 0
        %623 = vmatpush1.bf16.msra.mxu0 0
        %624 = vmatprep.subr.bf16.mxu0 0
        %625 = vmatpush1.bf16.msra.mxu0 0
        %626 = vmatprep.subr.bf16.mxu0 0
        %627 = vmatpush1.bf16.msra.mxu0 0
        %628 = vmatprep.subr.bf16.mxu0 0
        %629 = vmatpush1.bf16.msra.mxu0 0
        %630 = vmatprep.subr.bf16.mxu0 0
        %631 = vmatpush1.bf16.msra.mxu0 0
        %632 = vmatprep.subr.bf16.mxu0 0
        %633 = vmatpush1.bf16.msra.mxu0 0
        %634 = vmatprep.subr.bf16.mxu0 0
        %635 = vmatpush1.bf16.msra.mxu0 0
        %636 = vmatprep.subr.bf16.mxu0 0
        %637 = vmatpush1.bf16.msra.mxu0 0
        %638 = vmatprep.subr.bf16.mxu0 0
        %639 = vmatpush1.bf16.msra.mxu0 0
        %640 = vmatprep.subr.bf16.mxu0 0
        %641 = vmatpush1.bf16.msra.mxu0 0
        %642 = vmatprep.subr.bf16.mxu0 0
        %643 = vmatpush1.bf16.msra.mxu0 0
        %644 = vmatprep.subr.bf16.mxu0 0
        %645 = vmatpush1.bf16.msra.mxu0 0
        %646 = vmatprep.subr.bf16.mxu0 0
        %647 = vmatpush1.bf16.msra.mxu0 0
        %648 = vmatprep.mubr.bf16.mxu0 0
        %649 = vmatmul.mubr.bf16.gmra.mrb[0].mxu0 %v610
        %v650 = vpop.f32.mrb[0].mxu0
        %v651 = vadd.f32 0.0, %v650
        %v652 = vpop.f32.mrb[0].mxu0
        %v653 = vpop.f32.mrb[0].mxu0
        %v654 = vadd.f32 0.0, %v653
        %v655 = vpop.f32.mrb[0].mxu0
        %656 = vdwg.mxu0
        %v657 = vld [vmem:[%s4] sm:$0xf]
        %v658 = vld [vmem:[%s4 + $0x4] sm:$0xf]
        %v659 = vld [vmem:[%s4 + $0x8] sm:$0xf]
        %v660 = vld [vmem:[%s4 + $0xc] sm:$0xf]
        %v661 = vld [vmem:[%s5] sm:$0xf]
        %v662 = vld [vmem:[%s5 + $0x4] sm:$0xf]
        %v663 = vld [vmem:[%s5 + $0x8] sm:$0xf]
        %v664 = vld [vmem:[%s5 + $0xc] sm:$0xf]
        %v665 = vld [vmem:[%s6] sm:$0xff]
        %v666 = vld [vmem:[%s6 + $0x8] sm:$0xff]
        %v667 = vld [vmem:[%s6 + $0x10] sm:$0xff]
        %v668 = vld [vmem:[%s6 + $0x18] sm:$0xff]
        %v669 = vld [vmem:[%s7] sm:$0xff]
        %v670 = vld [vmem:[%s7 + $0x8] sm:$0xff]
        %v671 = vld [vmem:[%s7 + $0x10] sm:$0xff]
        %v672 = vld [vmem:[%s7 + $0x18] sm:$0xff]
        %v673 = vpack.c.bf16 %v654, %v651
        %v674 = vld [vmem:[%s466] sm:$0x7]
        %v679 = vunpack.c.l.b16 %v661
        %v680 = vunpack.c.l.b16 %v662
        %v681 = vunpack.c.l.b16 %v663
        %v682 = vunpack.c.l.b16 %v664
        %v683 = vpack.c.b16 %v680, %v679
        %v684 = vpack.c.b16 %v682, %v681
        %vm685 = vcmask 48128
        %v687 = vsel %vm685, %v683, 0
        %v690 = vsel %vm685, %v684, 0
        %vm692 = vcmask 1042432
        %v694 = vsel %vm692, %v674, 0
        %696 = vmatprep.subr.bf16.mxu0 0
        %697 = vmatpush1.bf16.msra.mxu0 %v694
        %698 = vmatprep.subr.bf16.mxu0 0
        %699 = vmatpush1.bf16.msra.mxu0 0
        %700 = vmatprep.subr.bf16.mxu0 0
        %701 = vmatpush1.bf16.msra.mxu0 0
        %702 = vmatprep.subr.bf16.mxu0 0
        %703 = vmatpush1.bf16.msra.mxu0 0
        %704 = vmatprep.subr.bf16.mxu0 0
        %705 = vmatpush1.bf16.msra.mxu0 0
        %706 = vmatprep.subr.bf16.mxu0 0
        %707 = vmatpush1.bf16.msra.mxu0 0
        %708 = vmatprep.subr.bf16.mxu0 0
        %709 = vmatpush1.bf16.msra.mxu0 0
        %710 = vmatprep.subr.bf16.mxu0 0
        %711 = vmatpush1.bf16.msra.mxu0 0
        %712 = vmatprep.subr.bf16.mxu0 0
        %713 = vmatpush1.bf16.msra.mxu0 0
        %714 = vmatprep.subr.bf16.mxu0 0
        %715 = vmatpush1.bf16.msra.mxu0 0
        %716 = vmatprep.subr.bf16.mxu0 0
        %717 = vmatpush1.bf16.msra.mxu0 0
        %718 = vmatprep.subr.bf16.mxu0 0
        %719 = vmatpush1.bf16.msra.mxu0 0
        %720 = vmatprep.subr.bf16.mxu0 0
        %721 = vmatpush1.bf16.msra.mxu0 0
        %722 = vmatprep.subr.bf16.mxu0 0
        %723 = vmatpush1.bf16.msra.mxu0 0
        %724 = vmatprep.subr.bf16.mxu0 0
        %725 = vmatpush1.bf16.msra.mxu0 0
        %726 = vmatprep.subr.bf16.mxu0 0
        %727 = vmatpush1.bf16.msra.mxu0 0
        %728 = vmatprep.mubr.bf16.mxu0 0
        %729 = vmatmul.mubr.bf16.gmra.mrb[0].mxu0 %v687
        %v730 = vpop.f32.mrb[0].mxu0
        %v731 = vadd.f32 0.0, %v730
        %v732 = vpop.f32.mrb[0].mxu0
        %v733 = vpop.f32.mrb[0].mxu0
        %v734 = vadd.f32 0.0, %v733
        %v735 = vpop.f32.mrb[0].mxu0
        %736 = vmatprep.mubr.bf16.mxu0 0
        %737 = vmatmul.mubr.bf16.gmra.mrb[0].mxu0 %v690
        %v738 = vpop.f32.mrb[0].mxu0
        %v739 = vadd.f32 0.0, %v738
        %v740 = vpop.f32.mrb[0].mxu0
        %v741 = vpop.f32.mrb[0].mxu0
        %v742 = vadd.f32 0.0, %v741
        %v743 = vpop.f32.mrb[0].mxu0
        %744 = vdwg.mxu0
        %v749 = vunpack.c.l.b16 %v657
        %v750 = vunpack.c.l.b16 %v658
        %v751 = vunpack.c.l.b16 %v659
        %v752 = vunpack.c.l.b16 %v660
        %v753 = vpack.c.b16 %v750, %v749
        %v754 = vpack.c.b16 %v752, %v751
        %vm755 = vcmask 80896
        %v757 = vsel %vm755, %v753, 0
        %v760 = vsel %vm755, %v754, 0
        %vm762 = vcmask 1044480
        %v764 = vsel %vm762, %v673, 0
        %766 = vmatprep.subr.bf16.mxu0 0
        %767 = vmatpush1.bf16.msra.mxu0 %v764
        %768 = vmatprep.subr.bf16.mxu0 0
        %769 = vmatpush1.bf16.msra.mxu0 0
        %770 = vmatprep.subr.bf16.mxu0 0
        %771 = vmatpush1.bf16.msra.mxu0 0
        %772 = vmatprep.subr.bf16.mxu0 0
        %773 = vmatpush1.bf16.msra.mxu0 0
        %774 = vmatprep.subr.bf16.mxu0 0
        %775 = vmatpush1.bf16.msra.mxu0 0
        %776 = vmatprep.subr.bf16.mxu0 0
        %777 = vmatpush1.bf16.msra.mxu0 0
        %778 = vmatprep.subr.bf16.mxu0 0
        %779 = vmatpush1.bf16.msra.mxu0 0
        %780 = vmatprep.subr.bf16.mxu0 0
        %781 = vmatpush1.bf16.msra.mxu0 0
        %782 = vmatprep.subr.bf16.mxu0 0
        %783 = vmatpush1.bf16.msra.mxu0 0
        %784 = vmatprep.subr.bf16.mxu0 0
        %785 = vmatpush1.bf16.msra.mxu0 0
        %786 = vmatprep.subr.bf16.mxu0 0
        %787 = vmatpush1.bf16.msra.mxu0 0
        %788 = vmatprep.subr.bf16.mxu0 0
        %789 = vmatpush1.bf16.msra.mxu0 0
        %790 = vmatprep.subr.bf16.mxu0 0
        %791 = vmatpush1.bf16.msra.mxu0 0
        %792 = vmatprep.subr.bf16.mxu0 0
        %793 = vmatpush1.bf16.msra.mxu0 0
        %794 = vmatprep.subr.bf16.mxu0 0
        %795 = vmatpush1.bf16.msra.mxu0 0
        %796 = vmatprep.subr.bf16.mxu0 0
        %797 = vmatpush1.bf16.msra.mxu0 0
        %798 = vmatprep.mubr.bf16.mxu0 0
        %799 = vmatmul.mubr.bf16.gmra.mrb[0].mxu0 %v757
        %v800 = vpop.f32.mrb[0].mxu0
        %v801 = vadd.f32 %v731, %v800
        %v802 = vpop.f32.mrb[0].mxu0
        %v803 = vpop.f32.mrb[0].mxu0
        %v804 = vadd.f32 %v734, %v803
        %v805 = vpop.f32.mrb[0].mxu0
        %806 = vmatprep.mubr.bf16.mxu0 0
        %807 = vmatmul.mubr.bf16.gmra.mrb[0].mxu0 %v760
        %v808 = vpop.f32.mrb[0].mxu0
        %v809 = vadd.f32 %v739, %v808
        %v810 = vpop.f32.mrb[0].mxu0
        %v811 = vpop.f32.mrb[0].mxu0
        %v812 = vadd.f32 %v742, %v811
        %v813 = vpop.f32.mrb[0].mxu0
        %814 = vdwg.mxu0
        %816 = vset.pattern.permute.xlu0 0
        %817 = vperm.xlu0 %816, %v665
        %v818 = vpop.permute.xlu0 %817
        %821 = vset.pattern.permute.xlu0 0
        %822 = vperm.xlu0 %821, %v666
        %v823 = vpop.permute.xlu0 %822
        %826 = vset.pattern.permute.xlu0 0
        %827 = vperm.xlu0 %826, %v667
        %v828 = vpop.permute.xlu0 %827
        %831 = vset.pattern.permute.xlu0 0
        %832 = vperm.xlu0 %831, %v668
        %v833 = vpop.permute.xlu0 %832
        %v835 = vmul.f32 %v801, %v818
        %v836 = vmul.f32 %v804, %v823
        %v837 = vmul.f32 %v809, %v828
        %v838 = vmul.f32 %v812, %v833
        %840 = vset.pattern.permute.xlu0 0
        %841 = vperm.xlu0 %840, %v669
        %v842 = vpop.permute.xlu0 %841
        %845 = vset.pattern.permute.xlu0 0
        %846 = vperm.xlu0 %845, %v670
        %v847 = vpop.permute.xlu0 %846
        %850 = vset.pattern.permute.xlu0 0
        %851 = vperm.xlu0 %850, %v671
        %v852 = vpop.permute.xlu0 %851
        %855 = vset.pattern.permute.xlu0 0
        %856 = vperm.xlu0 %855, %v672
        %v857 = vpop.permute.xlu0 %856
        %v859 = vadd.f32 %v835, %v842
        %v860 = vadd.f32 %v836, %v847
        %v861 = vadd.f32 %v837, %v852
        %v862 = vadd.f32 %v838, %v857
        %v863 = vmax.f32 %v859, 0.0
        %v864 = vmax.f32 %v860, 0.0
        %v865 = vmax.f32 %v861, 0.0
        %v866 = vmax.f32 %v862, 0.0
        %v867 = vld [vmem:[%s8] sm:$0xf]
        %v868 = vld [vmem:[%s8 + $0x4] sm:$0xf]
        %v869 = vld [vmem:[%s9] sm:$0xff]
        %v870 = vld [vmem:[%s9 + $0x8] sm:$0xff]
        %v871 = vld [vmem:[%s10] sm:$0xff]
        %v872 = vld [vmem:[%s10 + $0x8] sm:$0xff]
        %v873 = vpack.c.bf16 %v864, %v863
        %v874 = vpack.c.bf16 %v866, %v865
        %v877 = vunpack.c.l.b16 %v867
        %v878 = vunpack.c.l.b16 %v868
        %v879 = vpack.c.b16 %v878, %v877
        %vm880 = vcmask 261120
        %v882 = vsel %vm880, %v879, 0
        %884 = vmatprep.subr.bf16.mxu0 0
        %885 = vmatpush1.bf16.msra.mxu0 %v873
        %886 = vmatprep.subr.bf16.mxu0 0
        %887 = vmatpush1.bf16.msra.mxu0 %v874
        %888 = vmatprep.subr.bf16.mxu0 0
        %889 = vmatpush1.bf16.msra.mxu0 0
        %890 = vmatprep.subr.bf16.mxu0 0
        %891 = vmatpush1.bf16.msra.mxu0 0
        %892 = vmatprep.subr.bf16.mxu0 0
        %893 = vmatpush1.bf16.msra.mxu0 0
        %894 = vmatprep.subr.bf16.mxu0 0
        %895 = vmatpush1.bf16.msra.mxu0 0
        %896 = vmatprep.subr.bf16.mxu0 0
        %897 = vmatpush1.bf16.msra.mxu0 0
        %898 = vmatprep.subr.bf16.mxu0 0
        %899 = vmatpush1.bf16.msra.mxu0 0
        %900 = vmatprep.subr.bf16.mxu0 0
        %901 = vmatpush1.bf16.msra.mxu0 0
        %902 = vmatprep.subr.bf16.mxu0 0
        %903 = vmatpush1.bf16.msra.mxu0 0
        %904 = vmatprep.subr.bf16.mxu0 0
        %905 = vmatpush1.bf16.msra.mxu0 0
        %906 = vmatprep.subr.bf16.mxu0 0
        %907 = vmatpush1.bf16.msra.mxu0 0
        %908 = vmatprep.subr.bf16.mxu0 0
        %909 = vmatpush1.bf16.msra.mxu0 0
        %910 = vmatprep.subr.bf16.mxu0 0
        %911 = vmatpush1.bf16.msra.mxu0 0
        %912 = vmatprep.subr.bf16.mxu0 0
        %913 = vmatpush1.bf16.msra.mxu0 0
        %914 = vmatprep.subr.bf16.mxu0 0
        %915 = vmatpush1.bf16.msra.mxu0 0
        %916 = vmatprep.mubr.bf16.mxu0 0
        %917 = vmatmul.mubr.bf16.gmra.mrb[0].mxu0 %v882
        %v918 = vpop.f32.mrb[0].mxu0
        %v919 = vadd.f32 0.0, %v918
        %v920 = vpop.f32.mrb[0].mxu0
        %v921 = vpop.f32.mrb[0].mxu0
        %v922 = vadd.f32 0.0, %v921
        %v923 = vpop.f32.mrb[0].mxu0
        %924 = vdwg.mxu0
        %926 = vset.pattern.permute.xlu0 0
        %927 = vperm.xlu0 %926, %v869
        %v928 = vpop.permute.xlu0 %927
        %931 = vset.pattern.permute.xlu0 0
        %932 = vperm.xlu0 %931, %v870
        %v933 = vpop.permute.xlu0 %932
        %v935 = vmul.f32 %v919, %v928
        %v936 = vmul.f32 %v922, %v933
        %938 = vset.pattern.permute.xlu0 0
        %939 = vperm.xlu0 %938, %v871
        %v940 = vpop.permute.xlu0 %939
        %943 = vset.pattern.permute.xlu0 0
        %944 = vperm.xlu0 %943, %v872
        %v945 = vpop.permute.xlu0 %944
        %v947 = vadd.f32 %v935, %v940
        %v948 = vadd.f32 %v936, %v945
        %v949 = vmax.f32 %v947, 0.0
        %v950 = vmax.f32 %v948, 0.0
        %951 = vst [vmem:[%s448] sm:$0xff] %v949
        %952 = vst [vmem:[%s448 + $0x8] sm:$0xff] %v950
        %s953 = sand.u32 %s302, 1
        %s954 = scalar_lea.sflag [#allocation3], %s953
        %s955 = sand.u32 %s302, 1
        %s956 = smul.addr %s955, 16
        %s957 = scalar_lea.vmem [#allocation2], %s956
        // Predicated region
        $region65: #{tpu_custom_call.1} parent=63 // pred_check
          %p958 = pneg %p312
        $region66: #{tpu_custom_call.1} parent=63 // pred_check_branch
          %960 = sbr.rel (%p958) target = $region68
        $region67: #{tpu_custom_call.1} parent=63 // pred_region
          %s962 = ssub.s32 256, 256
          %963 = vsyncadd %s954, %s962
          %s964 = smul.addr %s29, 2
          %s965 = sadd.s32 %s30, %s964
          %s966 = smul.addr %s965, 128
          %s967 = scalar_lea.hbm %s11, %s966
          %s968 = sshll.u32 %s957, 4
          %s969 = int_to_ptr.vmem [resolvable:$true] %s968
          %974 = dma.vmem_to_hbm [thread:$0]  %s969, 256, %s967, %s954, 128, 128, 8
        $region68: #{tpu_custom_call.1} parent=63 // pred_fallthru
          _
      $region64: #{tpu_custom_call.1} parent=5 // pred_fallthru
        _
      %p975 = scmp.le.s32.totalorder 2, %s20
      // Predicated region
      $region69: #{tpu_custom_call.1} parent=5 // pred_check
        %p976 = pneg %p975
      $region70: #{tpu_custom_call.1} parent=5 // pred_check_branch
        %978 = sbr.rel (%p976) target = $region72
      $region71: #{tpu_custom_call.1} parent=5 // pred_region
        %s979 = ssub.s32 %s20, 2
        // Predicated region
        $region73: #{tpu_custom_call.1} parent=71 // pred_check
          %p980 = pneg %p318
        $region74: #{tpu_custom_call.1} parent=71 // pred_check_branch
          %982 = sbr.rel (%p980) target = $region76
        $region75: #{tpu_custom_call.1} parent=71 // pred_region
          %s983 = sand.u32 %s303, 1
          %s984 = scalar_lea.sflag [#allocation3], %s983
          %s985 = sand.u32 %s303, 1
          %s986 = smul.addr %s985, 16
          %s987 = scalar_lea.vmem [#allocation2], %s986
          %988 = dma.done %s984, 256
        $region76: #{tpu_custom_call.1} parent=71 // pred_fallthru
          _
      $region72: #{tpu_custom_call.1} parent=5 // pred_fallthru
        _
    $region6: #{tpu_custom_call.1} parent=1 // loop_footer
      %s24 = sadd.s32 1, %s20
    $region7: #{tpu_custom_call.1} parent=1 // loop_footer_branch
      %19 = sbr.rel target = $region3
    $region8: #{tpu_custom_call.1} parent=1 // loop_exit
      _
    %989 = vsyncpa [#allocation3], 1
    %s990 = scalar_lea.sflag [#allocation3], 1
    %991 = vsyncpa %s990, 1

</llo_original>
